<compile_context>
chip_gen: v6e
topology: v6e:2x2x1
jax: 0.10.0
libtpu: 0.0.40
codegen_flags: <defaults>
</compile_context>

<pallas_src>
import enum
from typing import NamedTuple

import jax
import jax.numpy as jnp
from jax import lax
from jax.experimental import pallas as pl
from jax.experimental.pallas import tpu as pltpu


class PowerLawType(enum.Enum):
    MIN = 0
    MAX = 1


class MetaData(NamedTuple):
    length: jnp.ndarray        # [B] path length, km
    frequency: jnp.ndarray     # [B] frequency, GHz
    polarization: jnp.ndarray  # [B] 1.0 = horizontal, 0.0 = vertical


def a_b_parameters(frequency, polarization):
    # TODO(synk): deterministic synthetic stand-in for the ITU-R P.838 a/b table lookup.
    a = 1.0e-4 * frequency ** 2.32 * (1.0 + 0.05 * polarization)
    b = 1.30 - 0.012 * frequency - 0.02 * polarization
    return a, b


_SENTINEL = -3.0e38   # "no dry value seen yet" marker for the baseline carry scan


def _round_up(x, m):
    return ((x + m - 1) // m) * m


def _make_kernel(Bt, Tt, window_size, threshold, r_min, wa_factor):
    W = int(window_size)
    assert 2 <= W <= 128, "window_size must be in [2, 128]"
    inv_w = 1.0 / float(W)
    inv_wm1 = 1.0 / float(W - 1)
    thr2 = float(threshold) * float(threshold)   # sigma > thr  <=>  var > thr^2 (thr >= 0)

    def kernel(tsl_max_ref, tsl_min_ref, rsl_max_ref, rsl_min_ref,
               inv_al_ref, inv_b_ref, rain_ref, wet_ref,
               halo_ref, carry_ref):
        t_step = pl.program_id(1)

        # ---- handle_attenuation_input ----
        att_max = tsl_max_ref[...] - rsl_min_ref[...]   # [Bt, Tt]
        att_min = tsl_min_ref[...] - rsl_max_ref[...]   # [Bt, Tt]

        # First time tile of every link block: the rolling window clamps indices at 0, so
        # the "previous tile" is att_max[:, 0] replicated; the baseline carry starts at
        # att_min[:, 0] (reference recurrence seeds baseline[0] = att_min[0] even if wet).
        @pl.when(t_step == 0)
        def _():
            halo_ref[...] = jnp.broadcast_to(att_max[:, 0:1], (Bt, Tt))
            carry_ref[...] = att_min[:, 0:1]

        t_idx = lax.broadcasted_iota(jnp.int32, (Bt, Tt), 1)   # time index on lanes

        # ---- STDWetDry: rolling unbiased variance over the trailing W samples.
        #      W-1 lane rolls of the mean-centered tile; for t < d the sample comes from
        #      the carried previous tile (halo) instead of the circular wrap, which also
        #      reproduces the clamp-at-0 behaviour on the first tile.  Both tiles are
        #      centered with the SAME constant (current tile mean) so the variance
        #      cancellation protection stays valid across the tile boundary. ----
        mu = jnp.mean(att_max, axis=-1, keepdims=True)          # [Bt, 1]
        c = att_max - mu
        p = halo_ref[...] - mu                                  # previous raw tile, centered
        s1 = c
        s2 = c * c
        for d in range(1, W):
            rc = pltpu.roll(c, d, axis=1)     # rc[t] = c[t - d]        (wraps for t < d)
            rp = pltpu.roll(p, d, axis=1)     # rp[t] = prev[Tt - d + t] for t < d
            term = jnp.where(t_idx >= d, rc, rp)
            s1 = s1 + term
            s2 = s2 + term * term
        var = (s2 - s1 * s1 * inv_w) * inv_wm1                  # unbiased (torch.std default)
        wet = var > thr2
        wet_ref[...] = wet.astype(jnp.float32)
        dry = jnp.logical_not(wet)

        # ---- ConstantBaseLine: carry the last dry att_min forward.  Lane 0 is seeded
        #      (dry ? att_min[0] : carried baseline) so it is ALWAYS valid; this both
        #      propagates the carry across time tiles and guarantees the Hillis-Steele
        #      scan's circular wrap is never selected (lanes t < s are provably already
        #      valid before the step of stride s).  Do not remove the lane-0 seed. ----
        seed0 = jnp.where(dry[:, 0:1], att_min[:, 0:1], carry_ref[...])   # [Bt, 1]
        value = jnp.where(dry, att_min, _SENTINEL)
        value = jnp.where(t_idx == 0, seed0, value)
        s = 1
        while s < Tt:
            shifted = pltpu.roll(value, s, axis=1)              # shifted[t] = value[t - s]
            value = jnp.where(value > 0.5 * _SENTINEL, value, shifted)
            s *= 2
        baseline = value                                        # [Bt, Tt], fully valid

        # ---- PowerLaw: R = (relu(att) / (a * L)) ** (1 / b), zeroed below r_min ----
        att = jnp.maximum(att_max - baseline - wa_factor, 0.0)
        ratio = att * inv_al_ref[...]                           # [Bt, Tt] * [Bt, 1]
        rain = jnp.where(ratio > 0.0,
                         jnp.exp(inv_b_ref[...] * jnp.log(jnp.maximum(ratio, 1e-30))),
                         0.0)
        rain_ref[...] = jnp.where(rain < r_min, 0.0, rain)

        # Carry state to the next time tile of this link block.
        halo_ref[...] = att_max
        carry_ref[...] = baseline[:, Tt - 1:Tt]

    return kernel


def two_step_constant(data, metadata, *, power_law_type=PowerLawType.MAX,
                      r_min=0.1, window_size=8, threshold=0.5, wa_factor=0.0,
                      b_tile=None, t_tile=None):
    """data: [B, 4, T] float32, channels = (tsl_max, tsl_min, rsl_max, rsl_min)."""
    B, C, T = data.shape
    assert C == 4
    # TODO(synk): PowerLawType.MIN/MAX sampling correction not modelled; both use the
    # instantaneous power law.
    a, b = a_b_parameters(metadata.frequency.astype(jnp.float32),
                          metadata.polarization.astype(jnp.float32))
    length = metadata.length.astype(jnp.float32)
    # Precompute per-link reciprocals so the kernel only multiplies.
    inv_al = (1.0 / (a * length))[:, None].astype(jnp.float32)   # [B, 1]
    inv_b = (1.0 / b)[:, None].astype(jnp.float32)               # [B, 1]

    # Tile selection: blocks big enough to amortise the ~600-cycle per-step pipeline
    # overhead and keep stores lane-dense, but well inside v7x's 64 MiB VMEM.
    if t_tile is not None:
        Tt = _round_up(int(t_tile), 128)
    else:
        Tt = min(_round_up(T, 128), 512)
    if b_tile is not None:
        Bt = max(8, _round_up(int(b_tile), 8))
    else:
        target = max(8, ((1 << 17) // Tt) // 8 * 8)   # ~128K f32 elements per block
        Bt = min(_round_up(B, 8), target)
    T_pad = _round_up(T, Tt)
    B_pad = _round_up(B, Bt)

    data = data.astype(jnp.float32)
    if T_pad != T or B_pad != B:
        # Edge-pad so padded lanes/rows stay physical and finite (they feed per-row means
        # and the lane-axis scans); padded outputs are sliced off below.
        data = jnp.pad(data, ((0, B_pad - B), (0, 0), (0, T_pad - T)), mode="edge")
        inv_al = jnp.pad(inv_al, ((0, B_pad - B), (0, 0)), mode="edge")
        inv_b = jnp.pad(inv_b, ((0, B_pad - B), (0, 0)), mode="edge")

    # Channel-major: four contiguous, (8,128)-aligned [B, T] planes instead of a (Bt, 4, T)
    # block (which would pad the size-4 channel dim to 8 sublanes and make every channel
    # slice a strided sublane gather).
    tsl_max, tsl_min, rsl_max, rsl_min = (data[:, i, :] for i in range(4))

    kernel = _make_kernel(Bt, Tt, window_size, threshold, r_min, wa_factor)
    grid = (B_pad // Bt, T_pad // Tt)   # batch parallel, time sequential (carried scratch)
    rain, wet = pl.pallas_call(
        kernel,
        grid=grid,
        in_specs=[
            pl.BlockSpec((Bt, Tt), lambda i, t: (i, t)),
            pl.BlockSpec((Bt, Tt), lambda i, t: (i, t)),
            pl.BlockSpec((Bt, Tt), lambda i, t: (i, t)),
            pl.BlockSpec((Bt, Tt), lambda i, t: (i, t)),
            pl.BlockSpec((Bt, 1), lambda i, t: (i, 0)),          # 1 / (a * length)
            pl.BlockSpec((Bt, 1), lambda i, t: (i, 0)),          # 1 / b
        ],
        out_specs=[
            pl.BlockSpec((Bt, Tt), lambda i, t: (i, t)),          # rain_rate
            pl.BlockSpec((Bt, Tt), lambda i, t: (i, t)),          # wet/dry classification
        ],
        out_shape=(
            jax.ShapeDtypeStruct((B_pad, T_pad), jnp.float32),
            jax.ShapeDtypeStruct((B_pad, T_pad), jnp.float32),
        ),
        scratch_shapes=[
            pltpu.VMEM((Bt, Tt), jnp.float32),   # previous time tile of raw att_max (halo source)
            pltpu.VMEM((Bt, 1), jnp.float32),    # running baseline carry
        ],
        compiler_params=pltpu.CompilerParams(
            dimension_semantics=("parallel", "arbitrary"),
            vmem_limit_bytes=48 * 1024 * 1024,
        ),
    )(tsl_max, tsl_min, rsl_max, rsl_min, inv_al, inv_b)
    if T_pad != T or B_pad != B:
        rain = rain[:B, :T]
        wet = wet[:B, :T]
    return rain, wet


if __name__ == "__main__":
    B, T = 4, 128
    key = jax.random.PRNGKey(0)
    k1, k2, k3 = jax.random.split(key, 3)
    tsl = 10.0 + 0.5 * jax.random.normal(k1, (B, T))
    rsl = -50.0 + 2.0 * jax.random.normal(k2, (B, T))
    spread = jnp.abs(jax.random.normal(k3, (B, T)))
    tsl_max, tsl_min = tsl + spread, tsl - spread
    rsl_max, rsl_min = rsl + spread, rsl - spread
    data = jnp.stack([tsl_max, tsl_min, rsl_max, rsl_min], axis=1).astype(jnp.float32)  # [B, 4, T]

    metadata = MetaData(
        length=jnp.array([1.5, 3.2, 2.0, 4.1], jnp.float32),
        frequency=jnp.array([18.0, 23.0, 25.0, 38.0], jnp.float32),
        polarization=jnp.array([1.0, 0.0, 1.0, 0.0], jnp.float32),
    )

    rain_rate, wet_dry = two_step_constant(
        data, metadata,
        power_law_type=PowerLawType.MAX,
        r_min=0.1, window_size=8, threshold=1.1, wa_factor=0.0,
    )
    jax.block_until_ready((rain_rate, wet_dry))
    assert rain_rate.shape == (B, T) and wet_dry.shape == (B, T)
    assert bool(jnp.all(jnp.isfinite(rain_rate))) and bool(jnp.all(jnp.isfinite(wet_dry)))
    print("KERNEL_OK")
</pallas_src>

<mosaic_0001>
module attributes {stable_mosaic.version = 11 : i64} {
  func.func @kernel(%arg0: i32, %arg1: i32, %arg2: memref<8x128xf32, #tpu.memory_space<vmem>>, %arg3: memref<8x128xf32, #tpu.memory_space<vmem>>, %arg4: memref<8x128xf32, #tpu.memory_space<vmem>>, %arg5: memref<8x128xf32, #tpu.memory_space<vmem>>, %arg6: memref<8x1xf32, #tpu.memory_space<vmem>>, %arg7: memref<8x1xf32, #tpu.memory_space<vmem>>, %arg8: memref<8x128xf32, #tpu.memory_space<vmem>>, %arg9: memref<8x128xf32, #tpu.memory_space<vmem>>, %arg10: memref<8x128xf32, #tpu.memory_space<vmem>>, %arg11: memref<8x1xf32, #tpu.memory_space<vmem>>) attributes {dimension_semantics = [#tpu.dimension_semantics<parallel>, #tpu.dimension_semantics<arbitrary>], iteration_bounds = array<i64: 1, 1>, scalar_prefetch = 0 : i64, scratch_operands = 2 : i64, tpu.core_type = #tpu.core_type<tc>, window_params = [{transform_indices = @transform_0, window_bounds = array<i64: 8, 128>}, {transform_indices = @transform_1, window_bounds = array<i64: 8, 128>}, {transform_indices = @transform_2, window_bounds = array<i64: 8, 128>}, {transform_indices = @transform_3, window_bounds = array<i64: 8, 128>}, {transform_indices = @transform_4, window_bounds = array<i64: 8, 1>}, {transform_indices = @transform_5, window_bounds = array<i64: 8, 1>}, {transform_indices = @transform_6, window_bounds = array<i64: 8, 128>}, {transform_indices = @transform_7, window_bounds = array<i64: 8, 128>}]} {
    %c0 = arith.constant 0 : index
    %c0_0 = arith.constant 0 : index
    %0 = vector.load %arg2[%c0, %c0_0] : memref<8x128xf32, #tpu.memory_space<vmem>>, vector<8x128xf32>
    %c0_1 = arith.constant 0 : index
    %c0_2 = arith.constant 0 : index
    %1 = vector.load %arg5[%c0_1, %c0_2] : memref<8x128xf32, #tpu.memory_space<vmem>>, vector<8x128xf32>
    %2 = arith.subf %0, %1 : vector<8x128xf32>
    %c0_3 = arith.constant 0 : index
    %c0_4 = arith.constant 0 : index
    %3 = vector.load %arg3[%c0_3, %c0_4] : memref<8x128xf32, #tpu.memory_space<vmem>>, vector<8x128xf32>
    %c0_5 = arith.constant 0 : index
    %c0_6 = arith.constant 0 : index
    %4 = vector.load %arg4[%c0_5, %c0_6] : memref<8x128xf32, #tpu.memory_space<vmem>>, vector<8x128xf32>
    %5 = arith.subf %3, %4 : vector<8x128xf32>
    %c0_i32 = arith.constant 0 : i32
    %6 = arith.cmpi eq, %arg1, %c0_i32 : i32
    %7 = arith.extui %6 : i1 to i32
    %c0_i32_7 = arith.constant 0 : i32
    %8 = arith.cmpi ne, %7, %c0_i32_7 : i32
    scf.if %8 {
      %154 = vector.extract_strided_slice %2 {offsets = [0, 0], sizes = [8, 1], strides = [1, 1]} : vector<8x128xf32> to vector<8x1xf32>
      %155 = vector.shape_cast %154 : vector<8x1xf32> to vector<8x1xf32>
      %156 = vector.broadcast %155 : vector<8x1xf32> to vector<8x128xf32>
      %c0_62 = arith.constant 0 : index
      %c0_63 = arith.constant 0 : index
      %157 = vector.load %arg10[%c0_62, %c0_63] : memref<8x128xf32, #tpu.memory_space<vmem>>, vector<8x128xf32>
      tpu.vector_store %arg10[%c0_62, %c0_63], %156 {strides = array<i32>} : memref<8x128xf32, #tpu.memory_space<vmem>>, vector<8x128xf32>,
      %158 = vector.extract_strided_slice %5 {offsets = [0, 0], sizes = [8, 1], strides = [1, 1]} : vector<8x128xf32> to vector<8x1xf32>
      %c0_64 = arith.constant 0 : index
      %c0_65 = arith.constant 0 : index
      %159 = vector.load %arg11[%c0_64, %c0_65] : memref<8x1xf32, #tpu.memory_space<vmem>>, vector<8x1xf32>
      tpu.vector_store %arg11[%c0_64, %c0_65], %158 {strides = array<i32>} : memref<8x1xf32, #tpu.memory_space<vmem>>, vector<8x1xf32>,
    } else {
    }
    %9 = tpu.iota {dimensions = array<i32: 1>} : vector<8x128xi32>
    %cst = arith.constant dense<0.000000e+00> : vector<8xf32>
    %10 = vector.multi_reduction <add>, %2, %cst [1] : vector<8x128xf32> to vector<8xf32>
    %11 = vector.shape_cast %10 : vector<8xf32> to vector<8x1xf32>
    %cst_8 = arith.constant 1.280000e+02 : f32
    %12 = vector.broadcast %cst_8 : f32 to vector<8x1xf32>
    %13 = arith.divf %11, %12 : vector<8x1xf32>
    %14 = vector.broadcast %13 : vector<8x1xf32> to vector<8x128xf32>
    %15 = arith.subf %2, %14 : vector<8x128xf32>
    %c0_9 = arith.constant 0 : index
    %c0_10 = arith.constant 0 : index
    %16 = vector.load %arg10[%c0_9, %c0_10] : memref<8x128xf32, #tpu.memory_space<vmem>>, vector<8x128xf32>
    %17 = vector.broadcast %13 : vector<8x1xf32> to vector<8x128xf32>
    %18 = arith.subf %16, %17 : vector<8x128xf32>
    %19 = arith.mulf %15, %15 : vector<8x128xf32>
    %c1_i32 = arith.constant 1 : i32
    %20 = tpu.dynamic_rotate %15 by %c1_i32 dim 1 : vector<8x128xf32>, i32 -> vector<8x128xf32>
    %c1_i32_11 = arith.constant 1 : i32
    %21 = tpu.dynamic_rotate %18 by %c1_i32_11 dim 1 : vector<8x128xf32>, i32 -> vector<8x128xf32>
    %c1_i32_12 = arith.constant 1 : i32
    %22 = vector.broadcast %c1_i32_12 : i32 to vector<8x128xi32>
    %23 = arith.cmpi sge, %9, %22 : vector<8x128xi32>
    %24 = arith.select %23, %20, %21 : vector<8x128xi1>, vector<8x128xf32>
    %25 = arith.addf %15, %24 : vector<8x128xf32>
    %26 = arith.mulf %24, %24 : vector<8x128xf32>
    %27 = arith.addf %19, %26 : vector<8x128xf32>
    %c2_i32 = arith.constant 2 : i32
    %28 = tpu.dynamic_rotate %15 by %c2_i32 dim 1 : vector<8x128xf32>, i32 -> vector<8x128xf32>
    %c2_i32_13 = arith.constant 2 : i32
    %29 = tpu.dynamic_rotate %18 by %c2_i32_13 dim 1 : vector<8x128xf32>, i32 -> vector<8x128xf32>
    %c2_i32_14 = arith.constant 2 : i32
    %30 = vector.broadcast %c2_i32_14 : i32 to vector<8x128xi32>
    %31 = arith.cmpi sge, %9, %30 : vector<8x128xi32>
    %32 = arith.select %31, %28, %29 : vector<8x128xi1>, vector<8x128xf32>
    %33 = arith.addf %25, %32 : vector<8x128xf32>
    %34 = arith.mulf %32, %32 : vector<8x128xf32>
    %35 = arith.addf %27, %34 : vector<8x128xf32>
    %c3_i32 = arith.constant 3 : i32
    %36 = tpu.dynamic_rotate %15 by %c3_i32 dim 1 : vector<8x128xf32>, i32 -> vector<8x128xf32>
    %c3_i32_15 = arith.constant 3 : i32
    %37 = tpu.dynamic_rotate %18 by %c3_i32_15 dim 1 : vector<8x128xf32>, i32 -> vector<8x128xf32>
    %c3_i32_16 = arith.constant 3 : i32
    %38 = vector.broadcast %c3_i32_16 : i32 to vector<8x128xi32>
    %39 = arith.cmpi sge, %9, %38 : vector<8x128xi32>
    %40 = arith.select %39, %36, %37 : vector<8x128xi1>, vector<8x128xf32>
    %41 = arith.addf %33, %40 : vector<8x128xf32>
    %42 = arith.mulf %40, %40 : vector<8x128xf32>
    %43 = arith.addf %35, %42 : vector<8x128xf32>
    %c4_i32 = arith.constant 4 : i32
    %44 = tpu.dynamic_rotate %15 by %c4_i32 dim 1 : vector<8x128xf32>, i32 -> vector<8x128xf32>
    %c4_i32_17 = arith.constant 4 : i32
    %45 = tpu.dynamic_rotate %18 by %c4_i32_17 dim 1 : vector<8x128xf32>, i32 -> vector<8x128xf32>
    %c4_i32_18 = arith.constant 4 : i32
    %46 = vector.broadcast %c4_i32_18 : i32 to vector<8x128xi32>
    %47 = arith.cmpi sge, %9, %46 : vector<8x128xi32>
    %48 = arith.select %47, %44, %45 : vector<8x128xi1>, vector<8x128xf32>
    %49 = arith.addf %41, %48 : vector<8x128xf32>
    %50 = arith.mulf %48, %48 : vector<8x128xf32>
    %51 = arith.addf %43, %50 : vector<8x128xf32>
    %c5_i32 = arith.constant 5 : i32
    %52 = tpu.dynamic_rotate %15 by %c5_i32 dim 1 : vector<8x128xf32>, i32 -> vector<8x128xf32>
    %c5_i32_19 = arith.constant 5 : i32
    %53 = tpu.dynamic_rotate %18 by %c5_i32_19 dim 1 : vector<8x128xf32>, i32 -> vector<8x128xf32>
    %c5_i32_20 = arith.constant 5 : i32
    %54 = vector.broadcast %c5_i32_20 : i32 to vector<8x128xi32>
    %55 = arith.cmpi sge, %9, %54 : vector<8x128xi32>
    %56 = arith.select %55, %52, %53 : vector<8x128xi1>, vector<8x128xf32>
    %57 = arith.addf %49, %56 : vector<8x128xf32>
    %58 = arith.mulf %56, %56 : vector<8x128xf32>
    %59 = arith.addf %51, %58 : vector<8x128xf32>
    %c6_i32 = arith.constant 6 : i32
    %60 = tpu.dynamic_rotate %15 by %c6_i32 dim 1 : vector<8x128xf32>, i32 -> vector<8x128xf32>
    %c6_i32_21 = arith.constant 6 : i32
    %61 = tpu.dynamic_rotate %18 by %c6_i32_21 dim 1 : vector<8x128xf32>, i32 -> vector<8x128xf32>
    %c6_i32_22 = arith.constant 6 : i32
    %62 = vector.broadcast %c6_i32_22 : i32 to vector<8x128xi32>
    %63 = arith.cmpi sge, %9, %62 : vector<8x128xi32>
    %64 = arith.select %63, %60, %61 : vector<8x128xi1>, vector<8x128xf32>
    %65 = arith.addf %57, %64 : vector<8x128xf32>
    %66 = arith.mulf %64, %64 : vector<8x128xf32>
    %67 = arith.addf %59, %66 : vector<8x128xf32>
    %c7_i32 = arith.constant 7 : i32
    %68 = tpu.dynamic_rotate %15 by %c7_i32 dim 1 : vector<8x128xf32>, i32 -> vector<8x128xf32>
    %c7_i32_23 = arith.constant 7 : i32
    %69 = tpu.dynamic_rotate %18 by %c7_i32_23 dim 1 : vector<8x128xf32>, i32 -> vector<8x128xf32>
    %c7_i32_24 = arith.constant 7 : i32
    %70 = vector.broadcast %c7_i32_24 : i32 to vector<8x128xi32>
    %71 = arith.cmpi sge, %9, %70 : vector<8x128xi32>
    %72 = arith.select %71, %68, %69 : vector<8x128xi1>, vector<8x128xf32>
    %73 = arith.addf %65, %72 : vector<8x128xf32>
    %74 = arith.mulf %72, %72 : vector<8x128xf32>
    %75 = arith.addf %67, %74 : vector<8x128xf32>
    %76 = arith.mulf %73, %73 : vector<8x128xf32>
    %cst_25 = arith.constant 1.250000e-01 : f32
    %77 = vector.broadcast %cst_25 : f32 to vector<8x128xf32>
    %78 = arith.mulf %76, %77 : vector<8x128xf32>
    %79 = arith.subf %75, %78 : vector<8x128xf32>
    %cst_26 = arith.constant 0.142857149 : f32
    %80 = vector.broadcast %cst_26 : f32 to vector<8x128xf32>
    %81 = arith.mulf %79, %80 : vector<8x128xf32>
    %cst_27 = arith.constant 1.210000e+00 : f32
    %82 = vector.broadcast %cst_27 : f32 to vector<8x128xf32>
    %83 = arith.cmpf ogt, %81, %82 : vector<8x128xf32>
    %84 = arith.extui %83 : vector<8x128xi1> to vector<8x128xi32>
    %85 = arith.sitofp %84 : vector<8x128xi32> to vector<8x128xf32>
    %c0_28 = arith.constant 0 : index
    %c0_29 = arith.constant 0 : index
    %86 = vector.load %arg9[%c0_28, %c0_29] : memref<8x128xf32, #tpu.memory_space<vmem>>, vector<8x128xf32>
    tpu.vector_store %arg9[%c0_28, %c0_29], %85 {strides = array<i32>} : memref<8x128xf32, #tpu.memory_space<vmem>>, vector<8x128xf32>,
    %cst_30 = arith.constant dense<true> : vector<8x128xi1>
    %87 = arith.xori %83, %cst_30 : vector<8x128xi1>
    %88 = vector.extract_strided_slice %87 {offsets = [0, 0], sizes = [8, 1], strides = [1, 1]} : vector<8x128xi1> to vector<8x1xi1>
    %89 = vector.extract_strided_slice %5 {offsets = [0, 0], sizes = [8, 1], strides = [1, 1]} : vector<8x128xf32> to vector<8x1xf32>
    %c0_31 = arith.constant 0 : index
    %c0_32 = arith.constant 0 : index
    %90 = vector.load %arg11[%c0_31, %c0_32] : memref<8x1xf32, #tpu.memory_space<vmem>>, vector<8x1xf32>
    %91 = arith.select %88, %89, %90 : vector<8x1xi1>, vector<8x1xf32>
    %cst_33 = arith.constant -3.000000e+38 : f32
    %92 = vector.broadcast %cst_33 : f32 to vector<8x128xf32>
    %93 = arith.select %87, %5, %92 : vector<8x128xi1>, vector<8x128xf32>
    %c0_i32_34 = arith.constant 0 : i32
    %94 = vector.broadcast %c0_i32_34 : i32 to vector<8x128xi32>
    %95 = arith.cmpi eq, %9, %94 : vector<8x128xi32>
    %96 = vector.shape_cast %91 : vector<8x1xf32> to vector<8x1xf32>
    %97 = vector.broadcast %96 : vector<8x1xf32> to vector<8x128xf32>
    %98 = arith.select %95, %97, %93 : vector<8x128xi1>, vector<8x128xf32>
    %c1_i32_35 = arith.constant 1 : i32
    %99 = tpu.dynamic_rotate %98 by %c1_i32_35 dim 1 : vector<8x128xf32>, i32 -> vector<8x128xf32>
    %cst_36 = arith.constant -1.500000e+38 : f32
    %100 = vector.broadcast %cst_36 : f32 to vector<8x128xf32>
    %101 = arith.cmpf ogt, %98, %100 : vector<8x128xf32>
    %102 = arith.select %101, %98, %99 : vector<8x128xi1>, vector<8x128xf32>
    %c2_i32_37 = arith.constant 2 : i32
    %103 = tpu.dynamic_rotate %102 by %c2_i32_37 dim 1 : vector<8x128xf32>, i32 -> vector<8x128xf32>
    %cst_38 = arith.constant -1.500000e+38 : f32
    %104 = vector.broadcast %cst_38 : f32 to vector<8x128xf32>
    %105 = arith.cmpf ogt, %102, %104 : vector<8x128xf32>
    %106 = arith.select %105, %102, %103 : vector<8x128xi1>, vector<8x128xf32>
    %c4_i32_39 = arith.constant 4 : i32
    %107 = tpu.dynamic_rotate %106 by %c4_i32_39 dim 1 : vector<8x128xf32>, i32 -> vector<8x128xf32>
    %cst_40 = arith.constant -1.500000e+38 : f32
    %108 = vector.broadcast %cst_40 : f32 to vector<8x128xf32>
    %109 = arith.cmpf ogt, %106, %108 : vector<8x128xf32>
    %110 = arith.select %109, %106, %107 : vector<8x128xi1>, vector<8x128xf32>
    %c8_i32 = arith.constant 8 : i32
    %111 = tpu.dynamic_rotate %110 by %c8_i32 dim 1 : vector<8x128xf32>, i32 -> vector<8x128xf32>
    %cst_41 = arith.constant -1.500000e+38 : f32
    %112 = vector.broadcast %cst_41 : f32 to vector<8x128xf32>
    %113 = arith.cmpf ogt, %110, %112 : vector<8x128xf32>
    %114 = arith.select %113, %110, %111 : vector<8x128xi1>, vector<8x128xf32>
    %c16_i32 = arith.constant 16 : i32
    %115 = tpu.dynamic_rotate %114 by %c16_i32 dim 1 : vector<8x128xf32>, i32 -> vector<8x128xf32>
    %cst_42 = arith.constant -1.500000e+38 : f32
    %116 = vector.broadcast %cst_42 : f32 to vector<8x128xf32>
    %117 = arith.cmpf ogt, %114, %116 : vector<8x128xf32>
    %118 = arith.select %117, %114, %115 : vector<8x128xi1>, vector<8x128xf32>
    %c32_i32 = arith.constant 32 : i32
    %119 = tpu.dynamic_rotate %118 by %c32_i32 dim 1 : vector<8x128xf32>, i32 -> vector<8x128xf32>
    %cst_43 = arith.constant -1.500000e+38 : f32
    %120 = vector.broadcast %cst_43 : f32 to vector<8x128xf32>
    %121 = arith.cmpf ogt, %118, %120 : vector<8x128xf32>
    %122 = arith.select %121, %118, %119 : vector<8x128xi1>, vector<8x128xf32>
    %c64_i32 = arith.constant 64 : i32
    %123 = tpu.dynamic_rotate %122 by %c64_i32 dim 1 : vector<8x128xf32>, i32 -> vector<8x128xf32>
    %cst_44 = arith.constant -1.500000e+38 : f32
    %124 = vector.broadcast %cst_44 : f32 to vector<8x128xf32>
    %125 = arith.cmpf ogt, %122, %124 : vector<8x128xf32>
    %126 = arith.select %125, %122, %123 : vector<8x128xi1>, vector<8x128xf32>
    %127 = arith.subf %2, %126 : vector<8x128xf32>
    %cst_45 = arith.constant 0.000000e+00 : f32
    %128 = vector.broadcast %cst_45 : f32 to vector<8x128xf32>
    %129 = arith.subf %127, %128 : vector<8x128xf32>
    %cst_46 = arith.constant 0.000000e+00 : f32
    %130 = vector.broadcast %cst_46 : f32 to vector<8x128xf32>
    %131 = arith.maximumf %129, %130 : vector<8x128xf32>
    %c0_47 = arith.constant 0 : index
    %c0_48 = arith.constant 0 : index
    %132 = vector.load %arg6[%c0_47, %c0_48] : memref<8x1xf32, #tpu.memory_space<vmem>>, vector<8x1xf32>
    %133 = vector.broadcast %132 : vector<8x1xf32> to vector<8x128xf32>
    %134 = arith.mulf %131, %133 : vector<8x128xf32>
    %cst_49 = arith.constant 0.000000e+00 : f32
    %135 = vector.broadcast %cst_49 : f32 to vector<8x128xf32>
    %136 = arith.cmpf ogt, %134, %135 : vector<8x128xf32>
    %c0_50 = arith.constant 0 : index
    %c0_51 = arith.constant 0 : index
    %137 = vector.load %arg7[%c0_50, %c0_51] : memref<8x1xf32, #tpu.memory_space<vmem>>, vector<8x1xf32>
    %cst_52 = arith.constant 1.000000e-30 : f32
    %138 = vector.broadcast %cst_52 : f32 to vector<8x128xf32>
    %139 = arith.maximumf %134, %138 : vector<8x128xf32>
    %140 = math.log %139 : vector<8x128xf32>
    %141 = vector.broadcast %137 : vector<8x1xf32> to vector<8x128xf32>
    %142 = arith.mulf %141, %140 : vector<8x128xf32>
    %143 = math.exp %142 : vector<8x128xf32>
    %cst_53 = arith.constant 0.000000e+00 : f32
    %144 = vector.broadcast %cst_53 : f32 to vector<8x128xf32>
    %145 = arith.select %136, %143, %144 : vector<8x128xi1>, vector<8x128xf32>
    %cst_54 = arith.constant 1.000000e-01 : f32
    %146 = vector.broadcast %cst_54 : f32 to vector<8x128xf32>
    %147 = arith.cmpf olt, %145, %146 : vector<8x128xf32>
    %cst_55 = arith.constant 0.000000e+00 : f32
    %148 = vector.broadcast %cst_55 : f32 to vector<8x128xf32>
    %149 = arith.select %147, %148, %145 : vector<8x128xi1>, vector<8x128xf32>
    %c0_56 = arith.constant 0 : index
    %c0_57 = arith.constant 0 : index
    %150 = vector.load %arg8[%c0_56, %c0_57] : memref<8x128xf32, #tpu.memory_space<vmem>>, vector<8x128xf32>
    tpu.vector_store %arg8[%c0_56, %c0_57], %149 {strides = array<i32>} : memref<8x128xf32, #tpu.memory_space<vmem>>, vector<8x128xf32>,
    %c0_58 = arith.constant 0 : index
    %c0_59 = arith.constant 0 : index
    %151 = vector.load %arg10[%c0_58, %c0_59] : memref<8x128xf32, #tpu.memory_space<vmem>>, vector<8x128xf32>
    tpu.vector_store %arg10[%c0_58, %c0_59], %2 {strides = array<i32>} : memref<8x128xf32, #tpu.memory_space<vmem>>, vector<8x128xf32>,
    %152 = vector.extract_strided_slice %126 {offsets = [0, 127], sizes = [8, 1], strides = [1, 1]} : vector<8x128xf32> to vector<8x1xf32>
    %c0_60 = arith.constant 0 : index
    %c0_61 = arith.constant 0 : index
    %153 = vector.load %arg11[%c0_60, %c0_61] : memref<8x1xf32, #tpu.memory_space<vmem>>, vector<8x1xf32>
    tpu.vector_store %arg11[%c0_60, %c0_61], %152 {strides = array<i32>} : memref<8x1xf32, #tpu.memory_space<vmem>>, vector<8x1xf32>,
    return
  }
  func.func @transform_0(%arg0: i32, %arg1: i32) -> (i32, i32) {
    %c0_i32 = arith.constant 0 : i32
    return %arg0, %arg1 : i32, i32
  }
  func.func @transform_1(%arg0: i32, %arg1: i32) -> (i32, i32) {
    %c0_i32 = arith.constant 0 : i32
    return %arg0, %arg1 : i32, i32
  }
  func.func @transform_2(%arg0: i32, %arg1: i32) -> (i32, i32) {
    %c0_i32 = arith.constant 0 : i32
    return %arg0, %arg1 : i32, i32
  }
  func.func @transform_3(%arg0: i32, %arg1: i32) -> (i32, i32) {
    %c0_i32 = arith.constant 0 : i32
    return %arg0, %arg1 : i32, i32
  }
  func.func @transform_4(%arg0: i32, %arg1: i32) -> (i32, i32) {
    %c0_i32 = arith.constant 0 : i32
    %c0_i32_0 = arith.constant 0 : i32
    return %arg0, %c0_i32 : i32, i32
  }
  func.func @transform_5(%arg0: i32, %arg1: i32) -> (i32, i32) {
    %c0_i32 = arith.constant 0 : i32
    %c0_i32_0 = arith.constant 0 : i32
    return %arg0, %c0_i32 : i32, i32
  }
  func.func @transform_6(%arg0: i32, %arg1: i32) -> (i32, i32) {
    %c0_i32 = arith.constant 0 : i32
    return %arg0, %arg1 : i32, i32
  }
  func.func @transform_7(%arg0: i32, %arg1: i32) -> (i32, i32) {
    %c0_i32 = arith.constant 0 : i32
    return %arg0, %arg1 : i32, i32
  }
}

</mosaic_0001>

<llo_original>
// kernel: tpu_custom_call.1
$region0: #{tpu_custom_call.1}
  #allocation0 [shape = 'u32[]', space=smem, size = 0x4, offset = 0x4, fixed_abs, tag = 'smem constant byte address 0x4 - core index']
  #allocation1 [shape = 'u32[144,128]{1,0:T(1,128)}', space=vmem, size = 0x12000, scoped, tag = 'internal scratch']
  #allocation2 [shape = 'f32[8,128]{1,0:T(8,128)}', space=vmem, size = 0x1000, scoped, tag = 'scratch operand']
  #allocation3 [shape = 'f32[8,1]{1,0:T(8,128)}', space=vmem, size = 0x1000, scoped, tag = 'scratch operand']
  %s0 = inlined_call_operand.vmem [shape: f32[8,128], index: 0, kind: input, shape index: {}]
  %s1 = inlined_call_operand.vmem [shape: f32[8,128], index: 1, kind: input, shape index: {}]
  %s2 = inlined_call_operand.hbm [shape: f32[8,128], index: 2, kind: input, shape index: {}]
  %s3 = inlined_call_operand.hbm [shape: f32[8,128], index: 3, kind: input, shape index: {}]
  %s4 = inlined_call_operand.vmem [shape: f32[8,1], index: 4, kind: input, shape index: {}]
  %s5 = inlined_call_operand.vmem [shape: f32[8,1], index: 5, kind: input, shape index: {}]
  %s6 = inlined_call_operand.hbm [shape: f32[8,128], index: 6, kind: output, shape index: {0}]
  %s7 = inlined_call_operand.hbm [shape: f32[8,128], index: 7, kind: output, shape index: {1}]
  %8 = xla_tuple %s6, %s7
  %s9 = sld [smem:[#allocation0]]
  $region54: #{tpu_custom_call.1} parent=0
    _
  %s11 = ssub.s32 1, %s9
  %s12 = scalar_select 0, %s11, %s9
  $region1: #{tpu_custom_call.1} parent=0
    #allocation4 [shape = 'u8[4096]{0}', space=vmem, size = 0x1000, scoped, tag = 'input window, operand 2, single buffered']
    #allocation5 [shape = 's32[1]{0}', space=sflag, size = 0x4, scoped, tag = 'scoped memory for tpu_custom_call.1']
    #allocation6 [shape = 's32[1]{0}', space=sflag, size = 0x4, scoped, tag = 'scoped memory for tpu_custom_call.1']
    #allocation7 [shape = 'u8[4096]{0}', space=vmem, size = 0x1000, scoped, tag = 'input window, operand 3, single buffered']
    #allocation8 [shape = 's32[1]{0}', space=sflag, size = 0x4, scoped, tag = 'scoped memory for tpu_custom_call.1']
    #allocation9 [shape = 'u8[4096]{0}', space=vmem, size = 0x1000, scoped, tag = 'output window, operand 0, single buffered']
    #allocation10 [shape = 'u8[4096]{0}', space=vmem, size = 0x1000, scoped, tag = 'output window, operand 1, single buffered']
    #allocation11 [shape = 's32[1]{0}', space=sflag, size = 0x4, scoped, tag = 'scoped memory for tpu_custom_call.1']
    %13 = vsyncpa [#allocation5], 0
    %14 = vsyncpa [#allocation8], 0
    %15 = vsyncpa [#allocation6], 0
    %16 = vsyncpa [#allocation11], 0
    // Predicated region
    $region2: #{tpu_custom_call.1} parent=1 // pred_check
      _
    $region3: #{tpu_custom_call.1} parent=1 // pred_check_branch
      %18 = sbr.rel (0) target = $region5
    $region4: #{tpu_custom_call.1} parent=1 // pred_region
      _
    $region5: #{tpu_custom_call.1} parent=1 // pred_fallthru
      _
    // Predicated region
    $region6: #{tpu_custom_call.1} parent=1 // pred_check
      _
    $region7: #{tpu_custom_call.1} parent=1 // pred_check_branch
      %20 = sbr.rel (0) target = $region9
    $region8: #{tpu_custom_call.1} parent=1 // pred_region
      _
    $region9: #{tpu_custom_call.1} parent=1 // pred_fallthru
      _
    // Predicated region
    $region10: #{tpu_custom_call.1} parent=1 // pred_check
      _
    $region11: #{tpu_custom_call.1} parent=1 // pred_check_branch
      %22 = sbr.rel (0) target = $region13
    $region12: #{tpu_custom_call.1} parent=1 // pred_region
      %s24 = ssub.s32 128, 128
      %25 = vsyncadd [#allocation5], %s24
      %s27 = sshll.u32 [#allocation4], 4
      %s28 = int_to_ptr.vmem [resolvable:$true] %s27
      %30 = dma.hbm_to_vmem [thread:$0]  %s2, 128, %s28, [#allocation5]
    $region13: #{tpu_custom_call.1} parent=1 // pred_fallthru
      _
    // Predicated region
    $region14: #{tpu_custom_call.1} parent=1 // pred_check
      _
    $region15: #{tpu_custom_call.1} parent=1 // pred_check_branch
      %32 = sbr.rel (0) target = $region17
    $region16: #{tpu_custom_call.1} parent=1 // pred_region
      %s34 = ssub.s32 128, 128
      %35 = vsyncadd [#allocation8], %s34
      %s37 = sshll.u32 [#allocation7], 4
      %s38 = int_to_ptr.vmem [resolvable:$true] %s37
      %40 = dma.hbm_to_vmem [thread:$0]  %s3, 128, %s38, [#allocation8]
    $region17: #{tpu_custom_call.1} parent=1 // pred_fallthru
      _
    // Predicated region
    $region18: #{tpu_custom_call.1} parent=1 // pred_check
      _
    $region19: #{tpu_custom_call.1} parent=1 // pred_check_branch
      %42 = sbr.rel (0) target = $region21
    $region20: #{tpu_custom_call.1} parent=1 // pred_region
      _
    $region21: #{tpu_custom_call.1} parent=1 // pred_fallthru
      _
    // Predicated region
    $region22: #{tpu_custom_call.1} parent=1 // pred_check
      _
    $region23: #{tpu_custom_call.1} parent=1 // pred_check_branch
      %44 = sbr.rel (0) target = $region25
    $region24: #{tpu_custom_call.1} parent=1 // pred_region
      _
    $region25: #{tpu_custom_call.1} parent=1 // pred_fallthru
      _
    // Predicated region
    $region26: #{tpu_custom_call.1} parent=1 // pred_check
      _
    $region27: #{tpu_custom_call.1} parent=1 // pred_check_branch
      %46 = sbr.rel (0) target = $region29
    $region28: #{tpu_custom_call.1} parent=1 // pred_region
      %47 = dma.done [#allocation5], 128
    $region29: #{tpu_custom_call.1} parent=1 // pred_fallthru
      _
    // Predicated region
    $region30: #{tpu_custom_call.1} parent=1 // pred_check
      _
    $region31: #{tpu_custom_call.1} parent=1 // pred_check_branch
      %49 = sbr.rel (0) target = $region33
    $region32: #{tpu_custom_call.1} parent=1 // pred_region
      %50 = dma.done [#allocation8], 128
    $region33: #{tpu_custom_call.1} parent=1 // pred_fallthru
      _
    %v51 = vld [vmem:[%s0] sm:$0xff]
    %v52 = vld [vmem:[#allocation7] sm:$0xff]
    %v53 = vsub.f32 %v51, %v52
    %v54 = vld [vmem:[%s1] sm:$0xff]
    %v55 = vld [vmem:[#allocation4] sm:$0xff]
    %v56 = vsub.f32 %v54, %v55
    %p57 = scmp.eq.s32.totalorder 0, 0
    // Predicated region
    $region34: #{tpu_custom_call.1} parent=1 // pred_check
      %p58 = pneg %p57
    $region35: #{tpu_custom_call.1} parent=1 // pred_check_branch
      %60 = sbr.rel (%p58) target = $region37
    $region36: #{tpu_custom_call.1} parent=1 // pred_region
      %62 = vset.pattern.permute.xlu0 0
      %63 = vperm.xlu0 %62, %v53
      %v64 = vpop.permute.xlu0 %63
      %66 = vst [vmem:[#allocation2] sm:$0xff] %v64
      %vm67 = vcmask 7168
      %68 = vst.msk [vmem:[#allocation3] sm:$0xff] %vm67, %v56
    $region37: #{tpu_custom_call.1} parent=1 // pred_fallthru
      _
    %v69 = vlaneseq
    %v70 = vand.u32 %v69, 127
    %71 = vadd.xlane.f32.xlu0 %v53
    %v72 = vpop.xlane.xlu0 %71
    %v73 = vrcp.pop 128.0
    %v74 = vmul.f32 %v72, %v73
    %v75 = vsub.f32 %v53, %v74
    %v76 = vld [vmem:[#allocation2] sm:$0xff]
    %v77 = vsub.f32 %v76, %v74
    %v78 = vmul.f32 %v75, %v75
    %79 = vrot.lane.b32.xlu0 %v75, 1
    %v80 = vpop.permute.xlu0 %79
    %81 = vrot.lane.b32.xlu0 %v77, 1
    %v82 = vpop.permute.xlu0 %81
    %vm83 = vcmp.ge.s32.totalorder %v70, 1
    %v84 = vsel %vm83, %v80, %v82
    %v85 = vadd.f32 %v75, %v84
    %v86 = vmul.f32 %v84, %v84
    %v87 = vadd.f32 %v78, %v86
    %88 = vrot.lane.b32.xlu0 %v75, 2
    %v89 = vpop.permute.xlu0 %88
    %90 = vrot.lane.b32.xlu0 %v77, 2
    %v91 = vpop.permute.xlu0 %90
    %vm92 = vcmp.ge.s32.totalorder %v70, 2
    %v93 = vsel %vm92, %v89, %v91
    %v94 = vadd.f32 %v85, %v93
    %v95 = vmul.f32 %v93, %v93
    %v96 = vadd.f32 %v87, %v95
    %97 = vrot.lane.b32.xlu0 %v75, 3
    %v98 = vpop.permute.xlu0 %97
    %99 = vrot.lane.b32.xlu0 %v77, 3
    %v100 = vpop.permute.xlu0 %99
    %vm101 = vcmp.ge.s32.totalorder %v70, 3
    %v102 = vsel %vm101, %v98, %v100
    %v103 = vadd.f32 %v94, %v102
    %v104 = vmul.f32 %v102, %v102
    %v105 = vadd.f32 %v96, %v104
    %106 = vrot.lane.b32.xlu0 %v75, 4
    %v107 = vpop.permute.xlu0 %106
    %108 = vrot.lane.b32.xlu0 %v77, 4
    %v109 = vpop.permute.xlu0 %108
    %vm110 = vcmp.ge.s32.totalorder %v70, 4
    %v111 = vsel %vm110, %v107, %v109
    %v112 = vadd.f32 %v103, %v111
    %v113 = vmul.f32 %v111, %v111
    %v114 = vadd.f32 %v105, %v113
    %115 = vrot.lane.b32.xlu0 %v75, 5
    %v116 = vpop.permute.xlu0 %115
    %117 = vrot.lane.b32.xlu0 %v77, 5
    %v118 = vpop.permute.xlu0 %117
    %vm119 = vcmp.ge.s32.totalorder %v70, 5
    %v120 = vsel %vm119, %v116, %v118
    %v121 = vadd.f32 %v112, %v120
    %v122 = vmul.f32 %v120, %v120
    %v123 = vadd.f32 %v114, %v122
    %124 = vrot.lane.b32.xlu0 %v75, 6
    %v125 = vpop.permute.xlu0 %124
    %126 = vrot.lane.b32.xlu0 %v77, 6
    %v127 = vpop.permute.xlu0 %126
    %vm128 = vcmp.ge.s32.totalorder %v70, 6
    %v129 = vsel %vm128, %v125, %v127
    %v130 = vadd.f32 %v121, %v129
    %v131 = vmul.f32 %v129, %v129
    %v132 = vadd.f32 %v123, %v131
    %133 = vrot.lane.b32.xlu0 %v75, 7
    %v134 = vpop.permute.xlu0 %133
    %135 = vrot.lane.b32.xlu0 %v77, 7
    %v136 = vpop.permute.xlu0 %135
    %vm137 = vcmp.ge.s32.totalorder %v70, 7
    %v138 = vsel %vm137, %v134, %v136
    %v139 = vadd.f32 %v130, %v138
    %v140 = vmul.f32 %v138, %v138
    %v141 = vadd.f32 %v132, %v140
    %v142 = vmul.f32 %v139, %v139
    %v143 = vmul.f32 %v142, 0.125
    %v144 = vsub.f32 %v141, %v143
    %v145 = vmul.f32 %v144, 0.14285715
    %vm146 = vcmp.gt.f32.partialorder %v145, 1.21
    %v147 = vsel %vm146, 1, 0
    %v148 = vcvt.s32.f32 %v147
    %149 = vst [vmem:[#allocation10] sm:$0xff] %v148
    %vm150 = vmxor %vm146, 1
    %v151 = vld [vmem:[#allocation3] sm:$0xff]
    %v152 = vsel %vm150, %v56, %v151
    %v153 = vsel %vm150, %v56, -3e+38
    %vm154 = vcmp.eq.s32.totalorder %v70, 0
    %156 = vset.pattern.permute.xlu0 0
    %157 = vperm.xlu0 %156, %v152
    %v158 = vpop.permute.xlu0 %157
    %v160 = vsel %vm154, %v158, %v153
    %161 = vrot.lane.b32.xlu0 %v160, 1
    %v162 = vpop.permute.xlu0 %161
    %vm163 = vcmp.gt.f32.partialorder %v160, -1.5e+38
    %v164 = vsel %vm163, %v160, %v162
    %165 = vrot.lane.b32.xlu0 %v164, 2
    %v166 = vpop.permute.xlu0 %165
    %vm167 = vcmp.gt.f32.partialorder %v164, -1.5e+38
    %v168 = vsel %vm167, %v164, %v166
    %169 = vrot.lane.b32.xlu0 %v168, 4
    %v170 = vpop.permute.xlu0 %169
    %vm171 = vcmp.gt.f32.partialorder %v168, -1.5e+38
    %v172 = vsel %vm171, %v168, %v170
    %173 = vrot.lane.b32.xlu0 %v172, 8
    %v174 = vpop.permute.xlu0 %173
    %vm175 = vcmp.gt.f32.partialorder %v172, -1.5e+38
    %v176 = vsel %vm175, %v172, %v174
    %177 = vrot.lane.b32.xlu0 %v176, 16
    %v178 = vpop.permute.xlu0 %177
    %vm179 = vcmp.gt.f32.partialorder %v176, -1.5e+38
    %v180 = vsel %vm179, %v176, %v178
    %181 = vrot.lane.b32.xlu0 %v180, 32
    %v182 = vpop.permute.xlu0 %181
    %vm183 = vcmp.gt.f32.partialorder %v180, -1.5e+38
    %v184 = vsel %vm183, %v180, %v182
    %185 = vrot.lane.b32.xlu0 %v184, 64
    %v186 = vpop.permute.xlu0 %185
    %vm187 = vcmp.gt.f32.partialorder %v184, -1.5e+38
    %v188 = vsel %vm187, %v184, %v186
    %v189 = vsub.f32 %v53, %v188
    %v190 = vmax.f32 %v189, 0.0
    %v191 = vld [vmem:[%s4] sm:$0xff]
    %193 = vset.pattern.permute.xlu0 0
    %194 = vperm.xlu0 %193, %v191
    %v195 = vpop.permute.xlu0 %194
    %v197 = vmul.f32 %v190, %v195
    %vm198 = vcmp.gt.f32.partialorder %v197, 0.0
    %v199 = vld [vmem:[%s5] sm:$0xff]
    %v200 = vmax.f32 %v197, 1e-30
    %v201 = vlog2.pop %v200
    %v202 = vmul.f32 %v201, 0.6931472
    %204 = vset.pattern.permute.xlu0 0
    %205 = vperm.xlu0 %204, %v199
    %v206 = vpop.permute.xlu0 %205
    %v208 = vmul.f32 %v206, %v202
    %v209 = vmul.f32 %v208, 1.442695
    %v210 = vpow.pop %v209
    %v211 = vsel %vm198, %v210, 0.0
    %vm212 = vcmp.lt.f32.partialorder %v211, 0.1
    %v213 = vsel %vm212, 0.0, %v211
    %214 = vst [vmem:[#allocation9] sm:$0xff] %v213
    %215 = vst [vmem:[#allocation2] sm:$0xff] %v53
    %217 = vrot.lane.b32.xlu0 %v188, 1
    %v218 = vpop.permute.xlu0 %217
    %vm220 = vcmask 7168
    %221 = vst.msk [vmem:[#allocation3] sm:$0xff] %vm220, %v218
    // Predicated region
    $region38: #{tpu_custom_call.1} parent=1 // pred_check
      _
    $region39: #{tpu_custom_call.1} parent=1 // pred_check_branch
      %223 = sbr.rel (0) target = $region41
    $region40: #{tpu_custom_call.1} parent=1 // pred_region
      %s225 = ssub.s32 128, 128
      %226 = vsyncadd [#allocation6], %s225
      %s228 = sshll.u32 [#allocation9], 4
      %s229 = int_to_ptr.vmem [resolvable:$true] %s228
      %231 = dma.vmem_to_hbm [thread:$0]  %s229, 128, %s6, [#allocation6]
    $region41: #{tpu_custom_call.1} parent=1 // pred_fallthru
      _
    // Predicated region
    $region42: #{tpu_custom_call.1} parent=1 // pred_check
      _
    $region43: #{tpu_custom_call.1} parent=1 // pred_check_branch
      %233 = sbr.rel (0) target = $region45
    $region44: #{tpu_custom_call.1} parent=1 // pred_region
      %s235 = ssub.s32 128, 128
      %236 = vsyncadd [#allocation11], %s235
      %s238 = sshll.u32 [#allocation10], 4
      %s239 = int_to_ptr.vmem [resolvable:$true] %s238
      %241 = dma.vmem_to_hbm [thread:$0]  %s239, 128, %s7, [#allocation11]
    $region45: #{tpu_custom_call.1} parent=1 // pred_fallthru
      _
    // Predicated region
    $region46: #{tpu_custom_call.1} parent=1 // pred_check
      _
    $region47: #{tpu_custom_call.1} parent=1 // pred_check_branch
      %243 = sbr.rel (0) target = $region49
    $region48: #{tpu_custom_call.1} parent=1 // pred_region
      %244 = dma.done [#allocation6], 128
    $region49: #{tpu_custom_call.1} parent=1 // pred_fallthru
      _
    // Predicated region
    $region50: #{tpu_custom_call.1} parent=1 // pred_check
      _
    $region51: #{tpu_custom_call.1} parent=1 // pred_check_branch
      %246 = sbr.rel (0) target = $region53
    $region52: #{tpu_custom_call.1} parent=1 // pred_region
      %247 = dma.done [#allocation11], 128
    $region53: #{tpu_custom_call.1} parent=1 // pred_fallthru
      _
    %248 = vsyncpa [#allocation5], 1
    %249 = vsyncpa [#allocation8], 1
    %250 = vsyncpa [#allocation6], 1
    %251 = vsyncpa [#allocation11], 1

</llo_original>
